<compile_context>
chip_gen: v5e
topology: v5e:2x2
jax: 0.10.0
libtpu: 0.0.40
codegen_flags: <defaults>
</compile_context>

<pallas_src>
import functools

import jax
import jax.numpy as jnp
from jax.experimental import pallas as pl
from jax.experimental.pallas import tpu as pltpu


def _round_up(x, m):
    return ((x + m - 1) // m) * m


def _self_attn_kernel(x_ref, bias_ref, wqkv_ref, wo_ref, bo_ref,
                      out_ref, attn_ref, *, bb, S, Dp, Sp):
    # x_ref:    (S, bb*Dp)   this step's batch elements; feature dim padded to Dp
    # bias_ref: (bb, 1, S)   additive key-padding bias: 0 (valid) / -inf (padded)
    # wqkv_ref: (Dp, 3*Dp)   [Wq^T * D**-0.25 | Wk^T | Wv^T], each in its own
    #                        Dp(=128)-aligned, zero-padded column block
    # wo_ref:   (Dp, Dp)     Wo^T zero-padded;   bo_ref: (1, Dp)
    # out_ref:  (S, bb*Dp)   attention output (seq-major, lane-dense)
    # attn_ref: (bb, S, Sp)  softmax weights, key dim zero-padded to Sp
    #
    # TODO(synk): for long sequences, tile over key blocks with an online
    # softmax (flash-style) instead of materializing (S, S) scores per batch.
    wqkv = wqkv_ref[...]
    wo = wo_ref[...]
    bo = bo_ref[...]

    for j in range(bb):                      # static unroll over batches in this step
        xj = x_ref[:, j * Dp:(j + 1) * Dp]                           # lane-aligned slice
        qkv = jnp.dot(xj, wqkv, preferred_element_type=jnp.float32)  # (S, 3*Dp)
        q = qkv[:, :Dp]            # already scaled by D**-0.25 (folded into Wq)
        k = qkv[:, Dp:2 * Dp]      # Dp-aligned slices -> no relayout
        v = qkv[:, 2 * Dp:]

        # scores = q @ k^T  (one 2D MXU matmul per batch element)
        s = jax.lax.dot_general(q, k, (((1,), (1,)), ((), ())),
                                preferred_element_type=jnp.float32)  # (S, S)
        s = s + bias_ref[j]                           # -inf on padded keys (exact)

        m = jnp.max(s, axis=-1, keepdims=True)
        e = jnp.exp(s - m)
        denom = jnp.sum(e, axis=-1, keepdims=True)
        # approx=True would use the (idle) EUP but breaks the 1e-5 tolerance
        # against the f32 reference, so keep the exact reciprocal.
        p = e * pl.reciprocal(denom, approx=False)
        # NOTE: a query whose keys are ALL padded yields NaN weights, exactly
        # like masked_fill(-inf) + softmax in the PyTorch module.
        # dropout(p=0.0) is the identity -> omitted.

        ctx = jnp.dot(p, v, preferred_element_type=jnp.float32)      # (S, Dp)
        out = jnp.dot(ctx, wo, preferred_element_type=jnp.float32) + bo
        out_ref[:, j * Dp:(j + 1) * Dp] = out.astype(out_ref.dtype)  # full-lane store

        if Sp > S:   # pad keys so the attn store is an unmasked, lane-dense vst
            p = jnp.concatenate(
                [p, jnp.zeros((S, Sp - S), dtype=p.dtype)], axis=-1)
        attn_ref[j] = p.astype(attn_ref.dtype)


def self_attention_layer(x_sbd, mask_pad_sb, params, *, block_b=1,
                         mxu_dtype=None, single_buffer_weights=False):
    """Forward pass of SelfAttentionLayer.

    x_sbd:       (S, B, D) float32, sequence-first (PyTorch layout).
    mask_pad_sb: (S, B) bool, True = padded key position.
    params:      (wq, wk, wv, wo, bo); w* are (D, D) nn.Linear weights
                 (y = x @ W^T), bo is (D,).
    Returns (attn_output (S, B, D), attn_weights (B, S, S)).
    """
    wq, wk, wv, wo, bo = params
    S, B, D = x_sbd.shape
    assert B % block_b == 0
    nb = B // block_b                       # grid steps over batch
    Dp = _round_up(D, 128)                  # lane-dense model dim
    Sp = _round_up(S, 128)                  # lane-dense key dim for attn output

    # ---- one-time parameter prep (constant-folded under jit in a real model) ----
    scale = 1.0 / (D ** 0.25)
    pad_dd = lambda w: jnp.pad(w, ((0, Dp - D), (0, Dp - D)))       # (D,D)->(Dp,Dp)
    wqkv = jnp.concatenate(                                          # (Dp, 3*Dp)
        [pad_dd(wq.T * scale), pad_dd(wk.T), pad_dd(wv.T)], axis=1)
    wo_p = pad_dd(wo.T)                                              # (Dp, Dp)
    bo_p = jnp.pad(bo, (0, Dp - D)).reshape(1, Dp)                   # (1, Dp)

    # Additive key-padding bias (0 valid / -inf padded): scores + bias replaces
    # masked_fill's compare+select and keeps the exact -inf semantics.
    bias = jnp.where(mask_pad_sb.T, -jnp.inf, 0.0).astype(jnp.float32)[:, None, :]

    # Seq-major end to end: no (S,B,D)<->(B,S,D) transposes anywhere. Batch
    # lives in lane-aligned column blocks of a (S, B*Dp) slab, so per-batch
    # slices in the kernel hit 128-lane tile boundaries. The feature pad is a
    # no-op whenever D is already a multiple of 128.
    x_pad = jnp.pad(x_sbd, ((0, 0), (0, 0), (0, Dp - D)))            # (S, B, Dp)
    x2 = x_pad.reshape(S, B * Dp)                                    # free reshape

    if mxu_dtype is not None:   # v6e/v7x: bf16 MXU operands, f32 accumulation
        x2 = x2.astype(mxu_dtype)
        wqkv = wqkv.astype(mxu_dtype)
        wo_p = wo_p.astype(mxu_dtype)

    w_kwargs = {}
    if single_buffer_weights and nb > 1:
        # Constant-index inputs don't need double buffers; halves their VMEM
        # footprint at real model sizes (e.g. D=1024 -> 12 MiB f32 for wqkv).
        w_kwargs = dict(pipeline_mode=pl.Buffered(1))

    kernel = functools.partial(_self_attn_kernel, bb=block_b, S=S, Dp=Dp, Sp=Sp)

    out2, attn_p = pl.pallas_call(
        kernel,
        out_shape=(jax.ShapeDtypeStruct((S, B * Dp), jnp.float32),
                   jax.ShapeDtypeStruct((B, S, Sp), jnp.float32)),
        grid_spec=pltpu.PrefetchScalarGridSpec(
            num_scalar_prefetch=0,
            grid=(nb,),
            in_specs=[
                pl.BlockSpec((S, block_b * Dp), lambda b: (0, b)),           # x
                pl.BlockSpec((block_b, 1, S), lambda b: (b, 0, 0)),          # mask bias
                pl.BlockSpec((Dp, 3 * Dp), lambda b: (0, 0), **w_kwargs),    # W_qkv^T
                pl.BlockSpec((Dp, Dp), lambda b: (0, 0), **w_kwargs),        # W_o^T
                pl.BlockSpec((1, Dp), lambda b: (0, 0), **w_kwargs),         # b_o
            ],
            out_specs=[
                pl.BlockSpec((S, block_b * Dp), lambda b: (0, b)),           # out
                pl.BlockSpec((block_b, S, Sp), lambda b: (b, 0, 0)),         # attn
            ],
        ),
        compiler_params=pltpu.CompilerParams(
            # Batch steps are independent -> shards across TCs (v7x has 2)
            # and pipelines the per-step x load / out+attn writeback.
            dimension_semantics=("parallel",),
            # Explicit scoped-VMEM budget; re-derive for real shapes and keep
            # the double-buffered blocks well under v7x's 64 MiB physical VMEM.
            vmem_limit_bytes=32 * 1024 * 1024,
        ),
    )(x2, bias, wqkv, wo_p, bo_p)

    # Strip the lane padding (cheap slices; no-ops when D, S are multiples of
    # 128). No output transpose: out2 is already seq-major.
    out_sbd = out2.reshape(S, B, Dp)[:, :, :D]
    attn_bss = attn_p[:, :, :S]
    return out_sbd, attn_bss


def _reference(x_sbd, mask_pad_sb, params):
    """Pure-JAX reference matching the PyTorch forward exactly."""
    wq, wk, wv, wo, bo = params
    q = x_sbd @ wq.T
    k = x_sbd @ wk.T
    v = x_sbd @ wv.T
    w = jnp.einsum('sbd,tbd->bst', q, k)                                  # (B, S, S)
    mask = jnp.transpose(mask_pad_sb, (1, 0))[:, None, :]                 # (B, 1, S)
    w = jnp.where(mask, -jnp.inf, w)
    w = w / (k.shape[-1] ** 0.25)
    w = jax.nn.softmax(w, axis=-1)
    out = jnp.einsum('bst,tbd->sbd', w, v)
    out = out @ wo.T + bo
    return out, w


if __name__ == "__main__":
    S, B, D = 8, 2, 32

    key = jax.random.PRNGKey(0)
    kx, kq, kk, kv, ko, kb = jax.random.split(key, 6)

    x = jax.random.normal(kx, (S, B, D), dtype=jnp.float32)

    # Deterministic parameter init (PyTorch Linear-like uniform scale).
    lim = 1.0 / (D ** 0.5)
    wq = jax.random.uniform(kq, (D, D), jnp.float32, -lim, lim)
    wk = jax.random.uniform(kk, (D, D), jnp.float32, -lim, lim)
    wv = jax.random.uniform(kv, (D, D), jnp.float32, -lim, lim)
    wo = jax.random.uniform(ko, (D, D), jnp.float32, -lim, lim)
    bo = jax.random.uniform(kb, (D,), jnp.float32, -lim, lim)
    params = (wq, wk, wv, wo, bo)

    # Padding mask: True = padded position (per-batch lengths 8 and 6).
    lengths = jnp.array([8, 6], dtype=jnp.int32)
    mask_pad = jnp.arange(S, dtype=jnp.int32)[:, None] >= lengths[None, :]  # (S, B)

    out, attn_w = self_attention_layer(x, mask_pad, params)
    out = jax.block_until_ready(out)
    attn_w = jax.block_until_ready(attn_w)

    ref_out, ref_w = _reference(x, mask_pad, params)
    assert out.shape == (S, B, D) and attn_w.shape == (B, S, S)
    assert jnp.allclose(out, ref_out, atol=1e-5, rtol=1e-5)
    assert jnp.allclose(attn_w, ref_w, atol=1e-5, rtol=1e-5)

    print("KERNEL_OK")
</pallas_src>

<mosaic_0001>
module attributes {stable_mosaic.version = 11 : i64} {
  func.func @_self_attn_kernel(%arg0: i32, %arg1: memref<8x128xf32, #tpu.memory_space<vmem>>, %arg2: memref<1x1x8xf32, #tpu.memory_space<vmem>>, %arg3: memref<128x384xf32, #tpu.memory_space<vmem>>, %arg4: memref<128x128xf32, #tpu.memory_space<vmem>>, %arg5: memref<1x128xf32, #tpu.memory_space<vmem>>, %arg6: memref<8x128xf32, #tpu.memory_space<vmem>>, %arg7: memref<1x8x128xf32, #tpu.memory_space<vmem>>) attributes {dimension_semantics = [#tpu.dimension_semantics<parallel>], iteration_bounds = array<i64: 2>, scalar_prefetch = 0 : i64, scratch_operands = 0 : i64, tpu.core_type = #tpu.core_type<tc>, window_params = [{transform_indices = @transform_0, window_bounds = array<i64: 8, 128>}, {transform_indices = @transform_1, window_bounds = array<i64: 1, 1, 8>}, {pipeline_mode = #tpu.pipeline_mode<synchronous>, transform_indices = @transform_2, window_bounds = array<i64: 128, 384>}, {pipeline_mode = #tpu.pipeline_mode<synchronous>, transform_indices = @transform_3, window_bounds = array<i64: 128, 128>}, {pipeline_mode = #tpu.pipeline_mode<synchronous>, transform_indices = @transform_4, window_bounds = array<i64: 1, 128>}, {transform_indices = @transform_5, window_bounds = array<i64: 8, 128>}, {transform_indices = @transform_6, window_bounds = array<i64: 1, 8, 128>}]} {
    %c0 = arith.constant 0 : index
    %c0_0 = arith.constant 0 : index
    %0 = vector.load %arg3[%c0, %c0_0] : memref<128x384xf32, #tpu.memory_space<vmem>>, vector<128x384xf32>
    %c0_1 = arith.constant 0 : index
    %c0_2 = arith.constant 0 : index
    %1 = vector.load %arg4[%c0_1, %c0_2] : memref<128x128xf32, #tpu.memory_space<vmem>>, vector<128x128xf32>
    %c0_3 = arith.constant 0 : index
    %c0_4 = arith.constant 0 : index
    %2 = vector.load %arg5[%c0_3, %c0_4] : memref<1x128xf32, #tpu.memory_space<vmem>>, vector<1x128xf32>
    %c0_5 = arith.constant 0 : index
    %c0_6 = arith.constant 0 : index
    %3 = vector.load %arg1[%c0_5, %c0_6] : memref<8x128xf32, #tpu.memory_space<vmem>>, vector<8x128xf32>
    %cst = arith.constant dense<0.000000e+00> : vector<8x384xf32>
    %4 = tpu.matmul %3, %0, %cst {dimension_numbers = #tpu.dot_dimension_numbers<[1], [0], [0], [1], [0, 0, 1, 1], [], []>} : vector<8x128xf32>, vector<128x384xf32>, vector<8x384xf32> -> vector<8x384xf32>
    %5 = vector.extract_strided_slice %4 {offsets = [0, 0], sizes = [8, 128], strides = [1, 1]} : vector<8x384xf32> to vector<8x128xf32>
    %6 = vector.extract_strided_slice %4 {offsets = [0, 128], sizes = [8, 128], strides = [1, 1]} : vector<8x384xf32> to vector<8x128xf32>
    %7 = vector.extract_strided_slice %4 {offsets = [0, 256], sizes = [8, 128], strides = [1, 1]} : vector<8x384xf32> to vector<8x128xf32>
    %cst_7 = arith.constant dense<0.000000e+00> : vector<8x8xf32>
    %8 = tpu.matmul %5, %6, %cst_7 {dimension_numbers = #tpu.dot_dimension_numbers<[1], [1], [0], [0], [0, 0, 1, 0], [], []>} : vector<8x128xf32>, vector<8x128xf32>, vector<8x8xf32> -> vector<8x8xf32>
    %c0_8 = arith.constant 0 : index
    %c0_9 = arith.constant 0 : index
    %c0_10 = arith.constant 0 : index
    %9 = vector.load %arg2[%c0_8, %c0_9, %c0_10] : memref<1x1x8xf32, #tpu.memory_space<vmem>>, vector<1x1x8xf32>
    %10 = vector.shape_cast %9 : vector<1x1x8xf32> to vector<1x8xf32>
    %11 = vector.broadcast %10 : vector<1x8xf32> to vector<8x8xf32>
    %12 = arith.addf %8, %11 : vector<8x8xf32>
    %cst_11 = arith.constant dense<0xFF800000> : vector<8xf32>
    %13 = vector.multi_reduction <maximumf>, %12, %cst_11 [1] : vector<8x8xf32> to vector<8xf32>
    %14 = vector.shape_cast %13 : vector<8xf32> to vector<8x1xf32>
    %15 = vector.broadcast %14 : vector<8x1xf32> to vector<8x8xf32>
    %16 = arith.subf %12, %15 : vector<8x8xf32>
    %17 = math.exp %16 : vector<8x8xf32>
    %cst_12 = arith.constant dense<0.000000e+00> : vector<8xf32>
    %18 = vector.multi_reduction <add>, %17, %cst_12 [1] : vector<8x8xf32> to vector<8xf32>
    %19 = vector.shape_cast %18 : vector<8xf32> to vector<8x1xf32>
    %20 = tpu.reciprocal %19 : vector<8x1xf32> -> vector<8x1xf32>
    %21 = vector.broadcast %20 : vector<8x1xf32> to vector<8x8xf32>
    %22 = arith.mulf %17, %21 : vector<8x8xf32>
    %cst_13 = arith.constant dense<0.000000e+00> : vector<8x128xf32>
    %23 = tpu.matmul %22, %7, %cst_13 {dimension_numbers = #tpu.dot_dimension_numbers<[1], [0], [0], [1], [0, 0, 1, 1], [], []>} : vector<8x8xf32>, vector<8x128xf32>, vector<8x128xf32> -> vector<8x128xf32>
    %cst_14 = arith.constant dense<0.000000e+00> : vector<8x128xf32>
    %24 = tpu.matmul %23, %1, %cst_14 {dimension_numbers = #tpu.dot_dimension_numbers<[1], [0], [0], [1], [0, 0, 1, 1], [], []>} : vector<8x128xf32>, vector<128x128xf32>, vector<8x128xf32> -> vector<8x128xf32>
    %25 = vector.broadcast %2 : vector<1x128xf32> to vector<8x128xf32>
    %26 = arith.addf %24, %25 : vector<8x128xf32>
    %c0_15 = arith.constant 0 : index
    %c0_16 = arith.constant 0 : index
    %27 = vector.load %arg6[%c0_15, %c0_16] : memref<8x128xf32, #tpu.memory_space<vmem>>, vector<8x128xf32>
    tpu.vector_store %arg6[%c0_15, %c0_16], %26 {strides = array<i32>} : memref<8x128xf32, #tpu.memory_space<vmem>>, vector<8x128xf32>,
    %cst_17 = arith.constant 0.000000e+00 : f32
    %28 = vector.broadcast %cst_17 : f32 to vector<8x120xf32>
    %29 = tpu.concatenate %22, %28 in 1 : vector<8x8xf32>, vector<8x120xf32> -> vector<8x128xf32>
    %c0_18 = arith.constant 0 : index
    %c0_19 = arith.constant 0 : index
    %c0_20 = arith.constant 0 : index
    %30 = vector.load %arg7[%c0_18, %c0_19, %c0_20] : memref<1x8x128xf32, #tpu.memory_space<vmem>>, vector<1x8x128xf32>
    %31 = vector.shape_cast %30 : vector<1x8x128xf32> to vector<8x128xf32>
    %32 = vector.shape_cast %29 : vector<8x128xf32> to vector<1x8x128xf32>
    tpu.vector_store %arg7[%c0_18, %c0_19, %c0_20], %32 {strides = array<i32>} : memref<1x8x128xf32, #tpu.memory_space<vmem>>, vector<1x8x128xf32>,
    return
  }
  func.func @transform_0(%arg0: i32) -> (i32, i32) {
    %c0_i32 = arith.constant 0 : i32
    %c0_i32_0 = arith.constant 0 : i32
    return %c0_i32, %arg0 : i32, i32
  }
  func.func @transform_1(%arg0: i32) -> (i32, i32, i32) {
    %c0_i32 = arith.constant 0 : i32
    %c0_i32_0 = arith.constant 0 : i32
    %c0_i32_1 = arith.constant 0 : i32
    return %arg0, %c0_i32, %c0_i32_0 : i32, i32, i32
  }
  func.func @transform_2(%arg0: i32) -> (i32, i32) {
    %c0_i32 = arith.constant 0 : i32
    %c0_i32_0 = arith.constant 0 : i32
    %c0_i32_1 = arith.constant 0 : i32
    return %c0_i32, %c0_i32_0 : i32, i32
  }
  func.func @transform_3(%arg0: i32) -> (i32, i32) {
    %c0_i32 = arith.constant 0 : i32
    %c0_i32_0 = arith.constant 0 : i32
    %c0_i32_1 = arith.constant 0 : i32
    return %c0_i32, %c0_i32_0 : i32, i32
  }
  func.func @transform_4(%arg0: i32) -> (i32, i32) {
    %c0_i32 = arith.constant 0 : i32
    %c0_i32_0 = arith.constant 0 : i32
    %c0_i32_1 = arith.constant 0 : i32
    return %c0_i32, %c0_i32_0 : i32, i32
  }
  func.func @transform_5(%arg0: i32) -> (i32, i32) {
    %c0_i32 = arith.constant 0 : i32
    %c0_i32_0 = arith.constant 0 : i32
    return %c0_i32, %arg0 : i32, i32
  }
  func.func @transform_6(%arg0: i32) -> (i32, i32, i32) {
    %c0_i32 = arith.constant 0 : i32
    %c0_i32_0 = arith.constant 0 : i32
    %c0_i32_1 = arith.constant 0 : i32
    return %arg0, %c0_i32, %c0_i32_0 : i32, i32, i32
  }
}

</mosaic_0001>

<llo_original>
// kernel: tpu_custom_call.1
$region0: #{tpu_custom_call.1}
  #allocation0 [shape = 'u32[]', space=smem, size = 0x4, offset = 0x4, fixed_abs, tag = 'smem constant byte address 0x4 - core index']
  #allocation1 [shape = 'u32[72,128]{1,0:T(1,128)}', space=vmem, size = 0x9000, scoped, tag = 'internal scratch']
  %s0 = inlined_call_operand.hbm [shape: f32[8,256], index: 0, kind: input, shape index: {}]
  %s1 = inlined_call_operand.hbm [shape: f32[2,1,8], index: 1, kind: input, shape index: {}]
  %s2 = inlined_call_operand.hbm [shape: f32[128,384], index: 2, kind: input, shape index: {}]
  %s3 = inlined_call_operand.hbm [shape: f32[128,128], index: 3, kind: input, shape index: {}]
  %s4 = inlined_call_operand.vmem [shape: f32[1,128], index: 4, kind: input, shape index: {}]
  %s5 = inlined_call_operand.hbm [shape: f32[8,256], index: 5, kind: output, shape index: {0}]
  %s6 = inlined_call_operand.hbm [shape: f32[2,8,128], index: 6, kind: output, shape index: {1}]
  %7 = xla_tuple %s5, %s6
  %s8 = sld [smem:[#allocation0]]
  $region77: #{tpu_custom_call.1} parent=0
    _
  %s10 = ssub.s32 1, %s8
  %s11 = scalar_select 0, %s10, %s8
  $region1: #{tpu_custom_call.1} parent=0
    #allocation2 [shape = 'u8[8192]{0}', space=vmem, size = 0x2000, scoped, tag = 'input window, operand 0']
    #allocation3 [shape = 's32[2]{0}', space=sflag, size = 0x8, scoped, tag = 'scoped memory for tpu_custom_call.1']
    #allocation4 [shape = 's32[2]{0}', space=sflag, size = 0x8, scoped, tag = 'scoped memory for tpu_custom_call.1']
    #allocation5 [shape = 'u8[1024]{0}', space=vmem, size = 0x400, scoped, tag = 'input window, operand 1']
    #allocation6 [shape = 's32[2]{0}', space=sflag, size = 0x8, scoped, tag = 'scoped memory for tpu_custom_call.1']
    #allocation7 [shape = 'u8[196608]{0}', space=vmem, size = 0x30000, scoped, tag = 'input window, operand 2, single buffered']
    #allocation8 [shape = 'u8[65536]{0}', space=vmem, size = 0x10000, scoped, tag = 'input window, operand 3, single buffered']
    #allocation9 [shape = 's32[1]{0}', space=sflag, size = 0x4, scoped, tag = 'scoped memory for tpu_custom_call.1']
    #allocation10 [shape = 'u8[8192]{0}', space=vmem, size = 0x2000, scoped, tag = 'output window, operand 0']
    #allocation11 [shape = 'u8[8192]{0}', space=vmem, size = 0x2000, scoped, tag = 'output window, operand 1']
    #allocation12 [shape = 's32[2]{0}', space=sflag, size = 0x8, scoped, tag = 'scoped memory for tpu_custom_call.1']
    %12 = vsyncpa [#allocation3], 0
    %s13 = scalar_lea.sflag [#allocation3], 1
    %14 = vsyncpa %s13, 0
    %15 = vsyncpa [#allocation6], 0
    %s16 = scalar_lea.sflag [#allocation6], 1
    %17 = vsyncpa %s16, 0
    %18 = vsyncpa [#allocation9], 0
    %19 = vsyncpa [#allocation4], 0
    %s20 = scalar_lea.sflag [#allocation4], 1
    %21 = vsyncpa %s20, 0
    %22 = vsyncpa [#allocation12], 0
    %s23 = scalar_lea.sflag [#allocation12], 1
    %24 = vsyncpa %s23, 0
    loop: start=0, step=1, limit=4
    $region2: #{tpu_custom_call.1} parent=1 // loop_pre_header
      _
    $region3: #{tpu_custom_call.1} parent=1 // loop_header
      %s26 = sphi 0, %s30
      %p27 = scmp.ge.s32.totalorder %s26, 4
      %s36 = sphi 0, %s38
      %s39 = sphi 0, %s36
      %s40 = sphi 0, %s39
      %s56 = sphi 0, %s40
      %s62 = sphi 0, %s64
      %s65 = sphi 0, %s62
      %s66 = sphi 0, %s65
      %s82 = sphi 0, %s66
      %s86 = sphi 0, %s86
      %s88 = sphi 0, %s86
      %s89 = sphi 0, %s88
      %s103 = sphi 0, %s89
      %s107 = sphi 0, %s107
      %s109 = sphi 0, %s107
      %s110 = sphi 0, %s109
      %s124 = sphi 0, %s110
      %s128 = sphi 0, %s128
      %s130 = sphi 0, %s128
      %s131 = sphi 0, %s130
      %s145 = sphi 0, %s131
      %s151 = sphi 0, %s153
      %s154 = sphi 0, %s151
      %s155 = sphi 0, %s154
      %s171 = sphi 0, %s155
      %s177 = sphi 0, %s179
      %s180 = sphi 0, %s177
      %s181 = sphi 0, %s180
      %s197 = sphi 0, %s181
    $region4: #{tpu_custom_call.1} parent=1 // loop_header_branch
      %29 = sbr.rel (%p27) target = $region8
    $region5: #{tpu_custom_call.1} parent=1 // loop_body
      %s31 = ssub.s32 %s26, 1
      %s32 = ssub.s32 %s26, 2
      %s33 = sadd.s32 %s26, 1
      %s34 = ssub.s32 %s26, %s33
      %p35 = scmp.eq.s32.totalorder %s34, 0
      %s37 = sadd.s32 %s36, 1
      %s38 = scalar_select %p35, %s36, %s37
      %p41 = pneg %p35
      %p42 = scmp.eq.s32.totalorder %s26, 1
      %p43 = por %p41, %p42
      %p44 = scmp.ne.s32.totalorder %s36, %s39
      %p45 = scmp.eq.s32.totalorder %s26, 0
      %p46 = por %p44, %p45
      %p47 = scmp.ne.s32.totalorder %s36, %s39
      %p48 = scmp.eq.s32.totalorder %s31, 1
      %p49 = por %p47, %p48
      %p50 = scmp.ne.s32.totalorder %s39, %s40
      %p51 = scmp.eq.s32.totalorder %s31, 0
      %p52 = por %p50, %p51
      %p53 = scmp.ne.s32.totalorder %s39, %s40
      %p54 = scmp.eq.s32.totalorder %s32, 1
      %p55 = por %p53, %p54
      %p57 = scmp.ne.s32.totalorder %s40, %s56
      %p58 = scmp.eq.s32.totalorder %s32, 0
      %p59 = por %p57, %p58
      %s60 = ssub.s32 %s26, %s33
      %p61 = scmp.eq.s32.totalorder %s60, 0
      %s63 = sadd.s32 %s62, 1
      %s64 = scalar_select %p61, %s62, %s63
      %p67 = pneg %p61
      %p68 = scmp.eq.s32.totalorder %s26, 1
      %p69 = por %p67, %p68
      %p70 = scmp.ne.s32.totalorder %s62, %s65
      %p71 = scmp.eq.s32.totalorder %s26, 0
      %p72 = por %p70, %p71
      %p73 = scmp.ne.s32.totalorder %s62, %s65
      %p74 = scmp.eq.s32.totalorder %s31, 1
      %p75 = por %p73, %p74
      %p76 = scmp.ne.s32.totalorder %s65, %s66
      %p77 = scmp.eq.s32.totalorder %s31, 0
      %p78 = por %p76, %p77
      %p79 = scmp.ne.s32.totalorder %s65, %s66
      %p80 = scmp.eq.s32.totalorder %s32, 1
      %p81 = por %p79, %p80
      %p83 = scmp.ne.s32.totalorder %s66, %s82
      %p84 = scmp.eq.s32.totalorder %s32, 0
      %p85 = por %p83, %p84
      %s87 = sadd.s32 %s86, 1
      %p90 = scmp.eq.s32.totalorder %s26, 1
      %p91 = scmp.ne.s32.totalorder %s86, %s88
      %p92 = scmp.eq.s32.totalorder %s26, 0
      %p93 = por %p91, %p92
      %p94 = scmp.ne.s32.totalorder %s86, %s88
      %p95 = scmp.eq.s32.totalorder %s31, 1
      %p96 = por %p94, %p95
      %p97 = scmp.ne.s32.totalorder %s88, %s89
      %p98 = scmp.eq.s32.totalorder %s31, 0
      %p99 = por %p97, %p98
      %p100 = scmp.ne.s32.totalorder %s88, %s89
      %p101 = scmp.eq.s32.totalorder %s32, 1
      %p102 = por %p100, %p101
      %p104 = scmp.ne.s32.totalorder %s89, %s103
      %p105 = scmp.eq.s32.totalorder %s32, 0
      %p106 = por %p104, %p105
      %s108 = sadd.s32 %s107, 1
      %p111 = scmp.eq.s32.totalorder %s26, 1
      %p112 = scmp.ne.s32.totalorder %s107, %s109
      %p113 = scmp.eq.s32.totalorder %s26, 0
      %p114 = por %p112, %p113
      %p115 = scmp.ne.s32.totalorder %s107, %s109
      %p116 = scmp.eq.s32.totalorder %s31, 1
      %p117 = por %p115, %p116
      %p118 = scmp.ne.s32.totalorder %s109, %s110
      %p119 = scmp.eq.s32.totalorder %s31, 0
      %p120 = por %p118, %p119
      %p121 = scmp.ne.s32.totalorder %s109, %s110
      %p122 = scmp.eq.s32.totalorder %s32, 1
      %p123 = por %p121, %p122
      %p125 = scmp.ne.s32.totalorder %s110, %s124
      %p126 = scmp.eq.s32.totalorder %s32, 0
      %p127 = por %p125, %p126
      %s129 = sadd.s32 %s128, 1
      %p132 = scmp.eq.s32.totalorder %s26, 1
      %p133 = scmp.ne.s32.totalorder %s128, %s130
      %p134 = scmp.eq.s32.totalorder %s26, 0
      %p135 = por %p133, %p134
      %p136 = scmp.ne.s32.totalorder %s128, %s130
      %p137 = scmp.eq.s32.totalorder %s31, 1
      %p138 = por %p136, %p137
      %p139 = scmp.ne.s32.totalorder %s130, %s131
      %p140 = scmp.eq.s32.totalorder %s31, 0
      %p141 = por %p139, %p140
      %p142 = scmp.ne.s32.totalorder %s130, %s131
      %p143 = scmp.eq.s32.totalorder %s32, 1
      %p144 = por %p142, %p143
      %p146 = scmp.ne.s32.totalorder %s131, %s145
      %p147 = scmp.eq.s32.totalorder %s32, 0
      %p148 = por %p146, %p147
      %s149 = ssub.s32 %s26, %s33
      %p150 = scmp.eq.s32.totalorder %s149, 0
      %s152 = sadd.s32 %s151, 1
      %s153 = scalar_select %p150, %s151, %s152
      %p156 = pneg %p150
      %p157 = scmp.eq.s32.totalorder %s26, 1
      %p158 = por %p156, %p157
      %p159 = scmp.ne.s32.totalorder %s151, %s154
      %p160 = scmp.eq.s32.totalorder %s26, 0
      %p161 = por %p159, %p160
      %p162 = scmp.ne.s32.totalorder %s151, %s154
      %p163 = scmp.eq.s32.totalorder %s31, 1
      %p164 = por %p162, %p163
      %p165 = scmp.ne.s32.totalorder %s154, %s155
      %p166 = scmp.eq.s32.totalorder %s31, 0
      %p167 = por %p165, %p166
      %p168 = scmp.ne.s32.totalorder %s154, %s155
      %p169 = scmp.eq.s32.totalorder %s32, 1
      %p170 = por %p168, %p169
      %p172 = scmp.ne.s32.totalorder %s155, %s171
      %p173 = scmp.eq.s32.totalorder %s32, 0
      %p174 = por %p172, %p173
      %s175 = ssub.s32 %s26, %s33
      %p176 = scmp.eq.s32.totalorder %s175, 0
      %s178 = sadd.s32 %s177, 1
      %s179 = scalar_select %p176, %s177, %s178
      %p182 = pneg %p176
      %p183 = scmp.eq.s32.totalorder %s26, 1
      %p184 = por %p182, %p183
      %p185 = scmp.ne.s32.totalorder %s177, %s180
      %p186 = scmp.eq.s32.totalorder %s26, 0
      %p187 = por %p185, %p186
      %p188 = scmp.ne.s32.totalorder %s177, %s180
      %p189 = scmp.eq.s32.totalorder %s31, 1
      %p190 = por %p188, %p189
      %p191 = scmp.ne.s32.totalorder %s180, %s181
      %p192 = scmp.eq.s32.totalorder %s31, 0
      %p193 = por %p191, %p192
      %p194 = scmp.ne.s32.totalorder %s180, %s181
      %p195 = scmp.eq.s32.totalorder %s32, 1
      %p196 = por %p194, %p195
      %p198 = scmp.ne.s32.totalorder %s181, %s197
      %p199 = scmp.eq.s32.totalorder %s32, 0
      %p200 = por %p198, %p199
      %p201 = scmp.le.s32.totalorder 1, %s26
      %p202 = scmp.lt.s32.totalorder %s26, 3
      %p203 = pnand %p201, %p202
      %p204 = pneg %p203
      // Predicated region
      $region9: #{tpu_custom_call.1} parent=5 // pred_check
        _
      $region10: #{tpu_custom_call.1} parent=5 // pred_check_branch
        %206 = sbr.rel (%p203) target = $region12
      $region11: #{tpu_custom_call.1} parent=5 // pred_region
        %s207 = ssub.s32 %s26, 1
        // Predicated region
        $region13: #{tpu_custom_call.1} parent=11 // pred_check
          %p208 = pneg %p99
        $region14: #{tpu_custom_call.1} parent=11 // pred_check_branch
          %210 = sbr.rel (%p208) target = $region16
        $region15: #{tpu_custom_call.1} parent=11 // pred_region
          %212 = vsyncadd [#allocation6], 0
          %s213 = sshll.u32 %s2, 4
          %s214 = int_to_ptr.hbm [resolvable:$true] %s213
          %s215 = sshll.u32 [#allocation7], 4
          %s216 = int_to_ptr.vmem [resolvable:$true] %s215
          %221 = dma.hbm_to_vmem [thread:$0]  %s214, 6144, %s216, [#allocation6], 384, 384, 24
        $region16: #{tpu_custom_call.1} parent=11 // pred_fallthru
          _
        // Predicated region
        $region17: #{tpu_custom_call.1} parent=11 // pred_check
          %p222 = pneg %p120
        $region18: #{tpu_custom_call.1} parent=11 // pred_check_branch
          %224 = sbr.rel (%p222) target = $region20
        $region19: #{tpu_custom_call.1} parent=11 // pred_region
          %226 = vsyncadd [#allocation9], 0
          %s227 = sshll.u32 %s3, 4
          %s228 = int_to_ptr.hbm [resolvable:$true] %s227
          %s229 = sshll.u32 [#allocation8], 4
          %s230 = int_to_ptr.vmem [resolvable:$true] %s229
          %235 = dma.hbm_to_vmem [thread:$0]  %s228, 2048, %s230, [#allocation9], 128, 128, 8
        $region20: #{tpu_custom_call.1} parent=11 // pred_fallthru
          _
        // Predicated region
        $region21: #{tpu_custom_call.1} parent=11 // pred_check
          %p236 = pneg %p141
        $region22: #{tpu_custom_call.1} parent=11 // pred_check_branch
          %238 = sbr.rel (%p236) target = $region24
        $region23: #{tpu_custom_call.1} parent=11 // pred_region
          _
        $region24: #{tpu_custom_call.1} parent=11 // pred_fallthru
          _
      $region12: #{tpu_custom_call.1} parent=5 // pred_fallthru
        _
      %p239 = scmp.lt.s32.totalorder %s26, 2
      // Predicated region
      $region25: #{tpu_custom_call.1} parent=5 // pred_check
        %p240 = pneg %p239
      $region26: #{tpu_custom_call.1} parent=5 // pred_check_branch
        %242 = sbr.rel (%p240) target = $region28
      $region27: #{tpu_custom_call.1} parent=5 // pred_region
        // Predicated region
        $region29: #{tpu_custom_call.1} parent=27 // pred_check
          %p243 = pneg %p46
        $region30: #{tpu_custom_call.1} parent=27 // pred_check_branch
          %245 = sbr.rel (%p243) target = $region32
        $region31: #{tpu_custom_call.1} parent=27 // pred_region
          %s246 = sand.u32 %s36, 1
          %s247 = scalar_lea.sflag [#allocation3], %s246
          %s248 = sand.u32 %s36, 1
          %s249 = smul.addr %s248, 8
          %s250 = scalar_lea.vmem [#allocation2], %s249
          %252 = vsyncadd %s247, 0
          %s253 = smul.addr %s26, 8
          %s254 = scalar_lea.hbm %s0, %s253
          %s256 = sshll.u32 %s254, 4
          %s257 = int_to_ptr.hbm [resolvable:$true] %s256
          %s258 = sshll.u32 %s250, 4
          %s259 = int_to_ptr.vmem [resolvable:$true] %s258
          %261 = dma.hbm_to_vmem [thread:$0]  %s257, 128, %s259, %s247
        $region32: #{tpu_custom_call.1} parent=27 // pred_fallthru
          _
        // Predicated region
        $region33: #{tpu_custom_call.1} parent=27 // pred_check
          %p262 = pneg %p72
        $region34: #{tpu_custom_call.1} parent=27 // pred_check_branch
          %264 = sbr.rel (%p262) target = $region36
        $region35: #{tpu_custom_call.1} parent=27 // pred_region
          %s265 = sand.u32 %s26, 1
          %s266 = scalar_lea.sflag [#allocation6], %s265
          %s267 = sand.u32 %s62, 1
          %s268 = scalar_lea.vmem [#allocation5], %s267
          %270 = vsyncadd %s266, 0
          %s271 = scalar_lea.hbm %s1, %s26
          %s273 = sshll.u32 %s271, 4
          %s274 = int_to_ptr.hbm [resolvable:$true] %s273
          %s275 = sshll.u32 %s268, 4
          %s276 = int_to_ptr.vmem [resolvable:$true] %s275
          %278 = dma.hbm_to_vmem [thread:$0]  %s274, 16, %s276, %s266
        $region36: #{tpu_custom_call.1} parent=27 // pred_fallthru
          _
      $region28: #{tpu_custom_call.1} parent=5 // pred_fallthru
        _
      %p279 = scmp.le.s32.totalorder 1, %s26
      %p280 = scmp.lt.s32.totalorder %s26, 3
      %p281 = pnand %p279, %p280
      %p282 = pneg %p281
      // Predicated region
      $region37: #{tpu_custom_call.1} parent=5 // pred_check
        _
      $region38: #{tpu_custom_call.1} parent=5 // pred_check_branch
        %284 = sbr.rel (%p281) target = $region40
      $region39: #{tpu_custom_call.1} parent=5 // pred_region
        %s285 = ssub.s32 %s26, 1
        %s286 = sand.u32 %s39, 1
        %s287 = scalar_lea.sflag [#allocation3], %s286
        %s288 = sand.u32 %s39, 1
        %s289 = smul.addr %s288, 8
        %s290 = scalar_lea.vmem [#allocation2], %s289
        // Predicated region
        $region41: #{tpu_custom_call.1} parent=39 // pred_check
          %p291 = pneg %p52
        $region42: #{tpu_custom_call.1} parent=39 // pred_check_branch
          %293 = sbr.rel (%p291) target = $region44
        $region43: #{tpu_custom_call.1} parent=39 // pred_region
          %295 = dma.done %s287, 128
        $region44: #{tpu_custom_call.1} parent=39 // pred_fallthru
          _
        %s296 = sand.u32 %s31, 1
        %s297 = scalar_lea.sflag [#allocation6], %s296
        %s298 = sand.u32 %s65, 1
        %s299 = scalar_lea.vmem [#allocation5], %s298
        // Predicated region
        $region45: #{tpu_custom_call.1} parent=39 // pred_check
          %p300 = pneg %p78
        $region46: #{tpu_custom_call.1} parent=39 // pred_check_branch
          %302 = sbr.rel (%p300) target = $region48
        $region47: #{tpu_custom_call.1} parent=39 // pred_region
          %304 = dma.done %s297, 16
        $region48: #{tpu_custom_call.1} parent=39 // pred_fallthru
          _
        // Predicated region
        $region49: #{tpu_custom_call.1} parent=39 // pred_check
          %p305 = pneg %p99
        $region50: #{tpu_custom_call.1} parent=39 // pred_check_branch
          %307 = sbr.rel (%p305) target = $region52
        $region51: #{tpu_custom_call.1} parent=39 // pred_region
          %309 = dma.done [#allocation6], 6144
        $region52: #{tpu_custom_call.1} parent=39 // pred_fallthru
          _
        // Predicated region
        $region53: #{tpu_custom_call.1} parent=39 // pred_check
          %p310 = pneg %p120
        $region54: #{tpu_custom_call.1} parent=39 // pred_check_branch
          %312 = sbr.rel (%p310) target = $region56
        $region55: #{tpu_custom_call.1} parent=39 // pred_region
          %314 = dma.done [#allocation9], 2048
        $region56: #{tpu_custom_call.1} parent=39 // pred_fallthru
          _
        %s315 = sand.u32 %s39, 1
        %s316 = scalar_lea.sflag [#allocation3], %s315
        %s317 = sand.u32 %s39, 1
        %s318 = smul.addr %s317, 8
        %s319 = scalar_lea.vmem [#allocation2], %s318
        %p320 = pneg %p52
        %p321 = pneg %p49
        %s322 = sand.u32 %s31, 1
        %s323 = scalar_lea.sflag [#allocation6], %s322
        %s324 = sand.u32 %s65, 1
        %s325 = scalar_lea.vmem [#allocation5], %s324
        %p326 = pneg %p78
        %p327 = pneg %p75
        %p328 = pneg %p99
        %p329 = pneg %p96
        %p330 = pneg %p120
        %p331 = pneg %p117
        %p332 = pneg %p141
        %p333 = pneg %p138
        %p334 = pneg %p167
        %p335 = pneg %p164
        %s336 = sand.u32 %s154, 1
        %s337 = scalar_lea.sflag [#allocation4], %s336
        %s338 = sand.u32 %s154, 1
        %s339 = smul.addr %s338, 8
        %s340 = scalar_lea.vmem [#allocation10], %s339
        %p341 = pneg %p193
        %p342 = pneg %p190
        %s343 = sand.u32 %s180, 1
        %s344 = scalar_lea.sflag [#allocation12], %s343
        %s345 = sand.u32 %s180, 1
        %s346 = smul.addr %s345, 8
        %s347 = scalar_lea.vmem [#allocation11], %s346
        %v348 = vld [vmem:[#allocation7] sm:$0xff]
        %v349 = vld [vmem:[#allocation7 + $0x8] sm:$0xff]
        %v350 = vld [vmem:[#allocation7 + $0x10] sm:$0xff]
        %v351 = vld [vmem:[#allocation7 + $0x18] sm:$0xff]
        %v352 = vld [vmem:[#allocation7 + $0x20] sm:$0xff]
        %v353 = vld [vmem:[#allocation7 + $0x28] sm:$0xff]
        %v354 = vld [vmem:[#allocation7 + $0x30] sm:$0xff]
        %v355 = vld [vmem:[#allocation7 + $0x38] sm:$0xff]
        %v356 = vld [vmem:[#allocation7 + $0x40] sm:$0xff]
        %v357 = vld [vmem:[#allocation7 + $0x48] sm:$0xff]
        %v358 = vld [vmem:[#allocation7 + $0x50] sm:$0xff]
        %v359 = vld [vmem:[#allocation7 + $0x58] sm:$0xff]
        %v360 = vld [vmem:[#allocation7 + $0x60] sm:$0xff]
        %v361 = vld [vmem:[#allocation7 + $0x68] sm:$0xff]
        %v362 = vld [vmem:[#allocation7 + $0x70] sm:$0xff]
        %v363 = vld [vmem:[#allocation7 + $0x78] sm:$0xff]
        %v364 = vld [vmem:[#allocation7 + $0x80] sm:$0xff]
        %v365 = vld [vmem:[#allocation7 + $0x88] sm:$0xff]
        %v366 = vld [vmem:[#allocation7 + $0x90] sm:$0xff]
        %v367 = vld [vmem:[#allocation7 + $0x98] sm:$0xff]
        %v368 = vld [vmem:[#allocation7 + $0xa0] sm:$0xff]
        %v369 = vld [vmem:[#allocation7 + $0xa8] sm:$0xff]
        %v370 = vld [vmem:[#allocation7 + $0xb0] sm:$0xff]
        %v371 = vld [vmem:[#allocation7 + $0xb8] sm:$0xff]
        %v372 = vld [vmem:[#allocation7 + $0xc0] sm:$0xff]
        %v373 = vld [vmem:[#allocation7 + $0xc8] sm:$0xff]
        %v374 = vld [vmem:[#allocation7 + $0xd0] sm:$0xff]
        %v375 = vld [vmem:[#allocation7 + $0xd8] sm:$0xff]
        %v376 = vld [vmem:[#allocation7 + $0xe0] sm:$0xff]
        %v377 = vld [vmem:[#allocation7 + $0xe8] sm:$0xff]
        %v378 = vld [vmem:[#allocation7 + $0xf0] sm:$0xff]
        %v379 = vld [vmem:[#allocation7 + $0xf8] sm:$0xff]
        %v380 = vld [vmem:[#allocation7 + $0x100] sm:$0xff]
        %v381 = vld [vmem:[#allocation7 + $0x108] sm:$0xff]
        %v382 = vld [vmem:[#allocation7 + $0x110] sm:$0xff]
        %v383 = vld [vmem:[#allocation7 + $0x118] sm:$0xff]
        %v384 = vld [vmem:[#allocation7 + $0x120] sm:$0xff]
        %v385 = vld [vmem:[#allocation7 + $0x128] sm:$0xff]
        %v386 = vld [vmem:[#allocation7 + $0x130] sm:$0xff]
        %v387 = vld [vmem:[#allocation7 + $0x138] sm:$0xff]
        %v388 = vld [vmem:[#allocation7 + $0x140] sm:$0xff]
        %v389 = vld [vmem:[#allocation7 + $0x148] sm:$0xff]
        %v390 = vld [vmem:[#allocation7 + $0x150] sm:$0xff]
        %v391 = vld [vmem:[#allocation7 + $0x158] sm:$0xff]
        %v392 = vld [vmem:[#allocation7 + $0x160] sm:$0xff]
        %v393 = vld [vmem:[#allocation7 + $0x168] sm:$0xff]
        %v394 = vld [vmem:[#allocation7 + $0x170] sm:$0xff]
        %v395 = vld [vmem:[#allocation7 + $0x178] sm:$0xff]
        %v396 = vld [vmem:[#allocation8] sm:$0xff]
        %v397 = vld [vmem:[#allocation8 + $0x8] sm:$0xff]
        %v398 = vld [vmem:[#allocation8 + $0x10] sm:$0xff]
        %v399 = vld [vmem:[#allocation8 + $0x18] sm:$0xff]
        %v400 = vld [vmem:[#allocation8 + $0x20] sm:$0xff]
        %v401 = vld [vmem:[#allocation8 + $0x28] sm:$0xff]
        %v402 = vld [vmem:[#allocation8 + $0x30] sm:$0xff]
        %v403 = vld [vmem:[#allocation8 + $0x38] sm:$0xff]
        %v404 = vld [vmem:[#allocation8 + $0x40] sm:$0xff]
        %v405 = vld [vmem:[#allocation8 + $0x48] sm:$0xff]
        %v406 = vld [vmem:[#allocation8 + $0x50] sm:$0xff]
        %v407 = vld [vmem:[#allocation8 + $0x58] sm:$0xff]
        %v408 = vld [vmem:[#allocation8 + $0x60] sm:$0xff]
        %v409 = vld [vmem:[#allocation8 + $0x68] sm:$0xff]
        %v410 = vld [vmem:[#allocation8 + $0x70] sm:$0xff]
        %v411 = vld [vmem:[#allocation8 + $0x78] sm:$0xff]
        %v412 = vld [vmem:[%s4] sm:$0x1]
        %v413 = vld [vmem:[%s290] sm:$0xff]
        %414 = vmatpush.msra.mxu0 %v393
        %415 = vmatpush.msra.mxu0 %v390
        %416 = vmatpush.msra.mxu0 %v387
        %417 = vmatpush.msra.mxu0 %v384
        %418 = vmatpush.msra.mxu0 %v381
        %419 = vmatpush.msra.mxu0 %v378
        %420 = vmatpush.msra.mxu0 %v375
        %421 = vmatpush.msra.mxu0 %v372
        %422 = vmatpush.msra.mxu0 %v369
        %423 = vmatpush.msra.mxu0 %v366
        %424 = vmatpush.msra.mxu0 %v363
        %425 = vmatpush.msra.mxu0 %v360
        %426 = vmatpush.msra.mxu0 %v357
        %427 = vmatpush.msra.mxu0 %v354
        %428 = vmatpush.msra.mxu0 %v351
        %429 = vmatpush.msra.mxu0 %v348
        %430 = vmatmul.f32.gmra.mxu0 %v413
        %v431 = vpop.f32.mrf.mxu0
        %v432 = vadd.f32 0.0, %v431
        %433 = vdwg.mxu0
        %434 = vmatpush.msra.mxu0 %v394
        %435 = vmatpush.msra.mxu0 %v391
        %436 = vmatpush.msra.mxu0 %v388
        %437 = vmatpush.msra.mxu0 %v385
        %438 = vmatpush.msra.mxu0 %v382
        %439 = vmatpush.msra.mxu0 %v379
        %440 = vmatpush.msra.mxu0 %v376
        %441 = vmatpush.msra.mxu0 %v373
        %442 = vmatpush.msra.mxu0 %v370
        %443 = vmatpush.msra.mxu0 %v367
        %444 = vmatpush.msra.mxu0 %v364
        %445 = vmatpush.msra.mxu0 %v361
        %446 = vmatpush.msra.mxu0 %v358
        %447 = vmatpush.msra.mxu0 %v355
        %448 = vmatpush.msra.mxu0 %v352
        %449 = vmatpush.msra.mxu0 %v349
        %450 = vmatmul.f32.gmra.mxu0 %v413
        %v451 = vpop.f32.mrf.mxu0
        %v452 = vadd.f32 0.0, %v451
        %453 = vdwg.mxu0
        %454 = vmatpush.msra.mxu0 %v395
        %455 = vmatpush.msra.mxu0 %v392
        %456 = vmatpush.msra.mxu0 %v389
        %457 = vmatpush.msra.mxu0 %v386
        %458 = vmatpush.msra.mxu0 %v383
        %459 = vmatpush.msra.mxu0 %v380
        %460 = vmatpush.msra.mxu0 %v377
        %461 = vmatpush.msra.mxu0 %v374
        %462 = vmatpush.msra.mxu0 %v371
        %463 = vmatpush.msra.mxu0 %v368
        %464 = vmatpush.msra.mxu0 %v365
        %465 = vmatpush.msra.mxu0 %v362
        %466 = vmatpush.msra.mxu0 %v359
        %467 = vmatpush.msra.mxu0 %v356
        %468 = vmatpush.msra.mxu0 %v353
        %469 = vmatpush.msra.mxu0 %v350
        %470 = vmatmul.f32.gmra.mxu0 %v413
        %v471 = vpop.f32.mrf.mxu0
        %v472 = vadd.f32 0.0, %v471
        %473 = vdwg.mxu0
        %v474 = vld [vmem:[%s299] sm:$0x1]
        %v476 = vperm.slane %v474, 0
        %478 = vmatpush.xpose.msra.mxu0 0.0
        %479 = vmatpush.xpose.msra.mxu0 0.0
        %480 = vmatpush.xpose.msra.mxu0 0.0
        %481 = vmatpush.xpose.msra.mxu0 0.0
        %482 = vmatpush.xpose.msra.mxu0 0.0
        %483 = vmatpush.xpose.msra.mxu0 0.0
        %484 = vmatpush.xpose.msra.mxu0 0.0
        %485 = vmatpush.xpose.msra.mxu0 0.0
        %486 = vmatpush.xpose.msra.mxu0 0.0
        %487 = vmatpush.xpose.msra.mxu0 0.0
        %488 = vmatpush.xpose.msra.mxu0 0.0
        %489 = vmatpush.xpose.msra.mxu0 0.0
        %490 = vmatpush.xpose.msra.mxu0 0.0
        %491 = vmatpush.xpose.msra.mxu0 0.0
        %492 = vmatpush.xpose.msra.mxu0 0.0
        %493 = vmatpush.xpose.msra.mxu0 %v452
        %494 = vmatmul.f32.gmra.mxu0 %v432
        %v495 = vpop.f32.mrf.mxu0
        %v496 = vadd.f32 %v476, %v495
        %497 = vdwg.mxu0
        %vm498 = vcmask 64512
        %v499 = vsel %vm498, %v496, -inf
        %500 = vmax.xlane.f32.xlu0 %v499
        %v501 = vpop.xlane.xlu0 %500
        %v502 = vsub.f32 %v496, %v501
        %v503 = vmul.f32 %v502, 1.442695
        %v504 = vpow.pop %v503
        %v505 = vsel %vm498, %v504, 0.0
        %506 = vadd.xlane.f32.xlu0 %v505
        %v507 = vpop.xlane.xlu0 %506
        %v508 = vrcp.pop %v507
        %v509 = vmul.f32 %v507, %v508
        %v510 = vsub.f32 1.0, %v509
        %v511 = vmul.f32 %v508, %v510
        %v512 = vadd.f32 %v508, %v511
        %vm513 = vweird.f32 %v507
        %vm514 = vweird.f32 %v508
        %vm515 = vmor %vm513, %vm514
        %v516 = vsel %vm515, %v508, %v512
        %v517 = vand.u32 2147483647, %v507
        %vm518 = vcmp.eq.f32.partialorder %v517, 8.507059e+37
        %v519 = vand.u32 %v507, 2147483648
        %v520 = vor.u32 1.1754944e-38, %v519
        %v521 = vsel %vm518, %v520, %v516
        %v522 = vmul.f32 %v504, %v521
        %v524 = vsel %vm498, %v522, 0
        %526 = vmatpush.msra.mxu0 0.0
        %527 = vmatpush.msra.mxu0 0.0
        %528 = vmatpush.msra.mxu0 0.0
        %529 = vmatpush.msra.mxu0 0.0
        %530 = vmatpush.msra.mxu0 0.0
        %531 = vmatpush.msra.mxu0 0.0
        %532 = vmatpush.msra.mxu0 0.0
        %533 = vmatpush.msra.mxu0 0.0
        %534 = vmatpush.msra.mxu0 0.0
        %535 = vmatpush.msra.mxu0 0.0
        %536 = vmatpush.msra.mxu0 0.0
        %537 = vmatpush.msra.mxu0 0.0
        %538 = vmatpush.msra.mxu0 0.0
        %539 = vmatpush.msra.mxu0 0.0
        %540 = vmatpush.msra.mxu0 0.0
        %541 = vmatpush.msra.mxu0 %v472
        %542 = vmatmul.f32.gmra.mxu0 %v524
        %v543 = vpop.f32.mrf.mxu0
        %v544 = vadd.f32 0.0, %v543
        %545 = vdwg.mxu0
        %v547 = vperm.slane %v412, 0
        %549 = vmatpush.msra.mxu0 %v411
        %550 = vmatpush.msra.mxu0 %v410
        %551 = vmatpush.msra.mxu0 %v409
        %552 = vmatpush.msra.mxu0 %v408
        %553 = vmatpush.msra.mxu0 %v407
        %554 = vmatpush.msra.mxu0 %v406
        %555 = vmatpush.msra.mxu0 %v405
        %556 = vmatpush.msra.mxu0 %v404
        %557 = vmatpush.msra.mxu0 %v403
        %558 = vmatpush.msra.mxu0 %v402
        %559 = vmatpush.msra.mxu0 %v401
        %560 = vmatpush.msra.mxu0 %v400
        %561 = vmatpush.msra.mxu0 %v399
        %562 = vmatpush.msra.mxu0 %v398
        %563 = vmatpush.msra.mxu0 %v397
        %564 = vmatpush.msra.mxu0 %v396
        %565 = vmatmul.f32.gmra.mxu0 %v544
        %v566 = vpop.f32.mrf.mxu0
        %v567 = vadd.f32 %v547, %v566
        %568 = vdwg.mxu0
        %569 = vst [vmem:[%s340] sm:$0xff] %v567
        %v570 = vsel %vm498, %v522, 0.0
        %571 = vst [vmem:[%s347] sm:$0xff] %v570
        %s572 = sand.u32 %s154, 1
        %s573 = scalar_lea.sflag [#allocation4], %s572
        %s574 = sand.u32 %s154, 1
        %s575 = smul.addr %s574, 8
        %s576 = scalar_lea.vmem [#allocation10], %s575
        %s577 = sand.u32 %s180, 1
        %s578 = scalar_lea.sflag [#allocation12], %s577
        %s579 = sand.u32 %s180, 1
        %s580 = smul.addr %s579, 8
        %s581 = scalar_lea.vmem [#allocation11], %s580
        // Predicated region
        $region57: #{tpu_custom_call.1} parent=39 // pred_check
          %p582 = pneg %p164
        $region58: #{tpu_custom_call.1} parent=39 // pred_check_branch
          %584 = sbr.rel (%p582) target = $region60
        $region59: #{tpu_custom_call.1} parent=39 // pred_region
          %586 = vsyncadd %s573, 0
          %s587 = smul.addr %s31, 8
          %s588 = scalar_lea.hbm %s5, %s587
          %s590 = sshll.u32 %s576, 4
          %s591 = int_to_ptr.vmem [resolvable:$true] %s590
          %s592 = sshll.u32 %s588, 4
          %s593 = int_to_ptr.hbm [resolvable:$true] %s592
          %595 = dma.vmem_to_hbm [thread:$0]  %s591, 128, %s593, %s573
        $region60: #{tpu_custom_call.1} parent=39 // pred_fallthru
          _
        // Predicated region
        $region61: #{tpu_custom_call.1} parent=39 // pred_check
          %p596 = pneg %p190
        $region62: #{tpu_custom_call.1} parent=39 // pred_check_branch
          %598 = sbr.rel (%p596) target = $region64
        $region63: #{tpu_custom_call.1} parent=39 // pred_region
          %600 = vsyncadd %s578, 0
          %s601 = smul.addr %s31, 8
          %s602 = scalar_lea.hbm %s6, %s601
          %s604 = sshll.u32 %s581, 4
          %s605 = int_to_ptr.vmem [resolvable:$true] %s604
          %s606 = sshll.u32 %s602, 4
          %s607 = int_to_ptr.hbm [resolvable:$true] %s606
          %609 = dma.vmem_to_hbm [thread:$0]  %s605, 128, %s607, %s578
        $region64: #{tpu_custom_call.1} parent=39 // pred_fallthru
          _
      $region40: #{tpu_custom_call.1} parent=5 // pred_fallthru
        _
      %p610 = scmp.le.s32.totalorder 2, %s26
      // Predicated region
      $region65: #{tpu_custom_call.1} parent=5 // pred_check
        %p611 = pneg %p610
      $region66: #{tpu_custom_call.1} parent=5 // pred_check_branch
        %613 = sbr.rel (%p611) target = $region68
      $region67: #{tpu_custom_call.1} parent=5 // pred_region
        %s614 = ssub.s32 %s26, 2
        // Predicated region
        $region69: #{tpu_custom_call.1} parent=67 // pred_check
          %p615 = pneg %p170
        $region70: #{tpu_custom_call.1} parent=67 // pred_check_branch
          %617 = sbr.rel (%p615) target = $region72
        $region71: #{tpu_custom_call.1} parent=67 // pred_region
          %s618 = sand.u32 %s155, 1
          %s619 = scalar_lea.sflag [#allocation4], %s618
          %s620 = sand.u32 %s155, 1
          %s621 = smul.addr %s620, 8
          %s622 = scalar_lea.vmem [#allocation10], %s621
          %624 = dma.done %s619, 128
        $region72: #{tpu_custom_call.1} parent=67 // pred_fallthru
          _
        // Predicated region
        $region73: #{tpu_custom_call.1} parent=67 // pred_check
          %p625 = pneg %p196
        $region74: #{tpu_custom_call.1} parent=67 // pred_check_branch
          %627 = sbr.rel (%p625) target = $region76
        $region75: #{tpu_custom_call.1} parent=67 // pred_region
          %s628 = sand.u32 %s181, 1
          %s629 = scalar_lea.sflag [#allocation12], %s628
          %s630 = sand.u32 %s181, 1
          %s631 = smul.addr %s630, 8
          %s632 = scalar_lea.vmem [#allocation11], %s631
          %634 = dma.done %s629, 128
        $region76: #{tpu_custom_call.1} parent=67 // pred_fallthru
          _
      $region68: #{tpu_custom_call.1} parent=5 // pred_fallthru
        _
    $region6: #{tpu_custom_call.1} parent=1 // loop_footer
      %s30 = sadd.s32 1, %s26
    $region7: #{tpu_custom_call.1} parent=1 // loop_footer_branch
      %25 = sbr.rel target = $region3
    $region8: #{tpu_custom_call.1} parent=1 // loop_exit
      _
    %635 = vsyncpa [#allocation3], 1
    %s636 = scalar_lea.sflag [#allocation3], 1
    %637 = vsyncpa %s636, 1
    %638 = vsyncpa [#allocation6], 1
    %s639 = scalar_lea.sflag [#allocation6], 1
    %640 = vsyncpa %s639, 1
    %641 = vsyncpa [#allocation9], 1
    %642 = vsyncpa [#allocation4], 1
    %s643 = scalar_lea.sflag [#allocation4], 1
    %644 = vsyncpa %s643, 1
    %645 = vsyncpa [#allocation12], 1
    %s646 = scalar_lea.sflag [#allocation12], 1
    %647 = vsyncpa %s646, 1

</llo_original>
